<compile_context>
chip_gen: v5e
topology: v5e:2x2
jax: 0.10.0
libtpu: 0.0.40
codegen_flags: <defaults>
</compile_context>

<pallas_src>
import math

import jax
import jax.numpy as jnp
from jax.experimental import pallas as pl
from jax.experimental.pallas import tpu as pltpu

IN_FEATURES = 32   # in_features != out_features -> Conv1d residual path is exercised
OUT_FEATURES = 16
KSIZE = 5
PAD = 2


def gcn_kernel(col_ref, adjbd_ref, w_ref, o_ref):
    """Single grid step handles the whole batch.

    col_ref   : (B*T, K*C_in + 1)   im2col of x (b-major rows) + ones bias column
    adjbd_ref : (B*T, B*T)          block-diagonal distance adjacency
    w_ref     : (K*C_in + 1, 2*C_out)  [support-path W | conv weight + bias row]
    o_ref     : (B*T, C_out)        output (wrapper reshapes to (B, T, C_out))
    """
    C_out = o_ref.shape[1]

    # Fused matmul: columns [0:C_out] = support = x @ W (center-tap rows of the
    # combined weight), columns [C_out:2*C_out] = Conv1d residual incl. bias.
    mm = jnp.dot(col_ref[...], w_ref[...],
                 preferred_element_type=jnp.float32)          # (B*T, 2*C_out)
    support = mm[:, :C_out]
    res = mm[:, C_out:]

    # Per-batch adj @ support for all batches in one MXU push (block-diag adj).
    y = jnp.dot(adjbd_ref[...], support,
                preferred_element_type=jnp.float32) + res     # (B*T, C_out)

    # Exact (erf-based) GELU, matching torch.nn.functional.gelu default;
    # one EUP/VPU pass over the full slab, single store.
    inv_sqrt2 = jnp.float32(1.0 / math.sqrt(2.0))
    o_ref[...] = (0.5 * y * (1.0 + jax.lax.erf(y * inv_sqrt2))).astype(o_ref.dtype)


def gcn_forward(x, weight, conv_w, conv_b):
    """x: (B, T, C_in) f32; weight: (C_in, C_out); conv_w: (C_out, C_in, K); conv_b: (C_out,)."""
    B, T, C_in = x.shape
    C_out = weight.shape[1]
    Kc = KSIZE * C_in
    f32 = jnp.float32

    # DistanceAdj: adj[i, j] = exp(-|i - j| / e); batch-invariant -> build once,
    # and lift the per-batch matmul into one contraction via kron(I_B, adj).
    idx = jnp.arange(T, dtype=f32)
    adj = jnp.exp(-jnp.abs(idx[:, None] - idx[None, :]) / jnp.float32(math.e))
    adj_bd = jnp.kron(jnp.eye(B, dtype=f32), adj)                    # (B*T, B*T)

    # im2col for Conv1d(C_in -> C_out, k=5, pad=2), channels-last, + ones column
    # (bias) so the bias folds into the fused matmul.
    x_pad = jnp.pad(x, ((0, 0), (PAD, PAD), (0, 0)))                 # (B, T+2P, C_in)
    taps = [x_pad[:, k:k + T, :] for k in range(KSIZE)]
    col = jnp.concatenate(taps + [jnp.ones((B, T, 1), x.dtype)], axis=2)
    col = col.reshape(B * T, Kc + 1)                                 # (B*T, K*C_in+1)

    # Combined weight: [support path | residual conv path (+ bias row)].
    #   col[r, k*C_in + c] = x[b, t + k - PAD, c]  (zeros out of range), r = b*T+t
    #   support needs W at the center tap (k = PAD); conv path needs conv_w[o,c,k]
    #   at row k*C_in + c and conv_b in the ones row.
    cw_flat = jnp.transpose(conv_w, (2, 1, 0)).reshape(Kc, C_out)
    w_comb = jnp.zeros((Kc + 1, 2 * C_out), f32)
    w_comb = w_comb.at[PAD * C_in:(PAD + 1) * C_in, :C_out].set(weight)
    w_comb = w_comb.at[:Kc, C_out:].set(cw_flat)
    w_comb = w_comb.at[Kc, C_out:].set(conv_b)

    out_flat = pl.pallas_call(
        gcn_kernel,
        out_shape=jax.ShapeDtypeStruct((B * T, C_out), x.dtype),
        grid_spec=pltpu.PrefetchScalarGridSpec(
            num_scalar_prefetch=0,
            grid=(1,),
            in_specs=[
                pl.BlockSpec((B * T, Kc + 1), lambda i: (0, 0)),
                pl.BlockSpec((B * T, B * T), lambda i: (0, 0)),
                pl.BlockSpec((Kc + 1, 2 * C_out), lambda i: (0, 0)),
            ],
            out_specs=pl.BlockSpec((B * T, C_out), lambda i: (0, 0)),
        ),
        compiler_params=pltpu.CompilerParams(
            dimension_semantics=("arbitrary",)),
    )(col, adj_bd, w_comb)

    # Contiguous (free) reshape back to the PyTorch output layout.
    return out_flat.reshape(B, T, C_out)


if __name__ == "__main__":
    key = jax.random.PRNGKey(0)
    kx, kw, kcw, kcb = jax.random.split(key, 4)

    B, T = 2, 16
    x = jax.random.normal(kx, (B, T, IN_FEATURES), dtype=jnp.float32)

    # GraphConvolution.weight ~ xavier_uniform_
    bound = math.sqrt(6.0 / (IN_FEATURES + OUT_FEATURES))
    weight = jax.random.uniform(kw, (IN_FEATURES, OUT_FEATURES), jnp.float32,
                                -bound, bound)

    # Conv1d default init (kaiming_uniform with a=sqrt(5)) -> U(-1/sqrt(fan_in), +)
    fan_in = IN_FEATURES * KSIZE
    cbound = 1.0 / math.sqrt(fan_in)
    conv_w = jax.random.uniform(kcw, (OUT_FEATURES, IN_FEATURES, KSIZE),
                                jnp.float32, -cbound, cbound)
    conv_b = jax.random.uniform(kcb, (OUT_FEATURES,), jnp.float32,
                                -cbound, cbound)

    out = jax.jit(gcn_forward)(x, weight, conv_w, conv_b)
    jax.block_until_ready(out)
    assert out.shape == (B, T, OUT_FEATURES), out.shape
    assert out.dtype == jnp.float32

    # Pure-JAX reference (high precision) to guard the weight-fusion layout.
    hi = jax.lax.Precision.HIGHEST
    idx = jnp.arange(T, dtype=jnp.float32)
    adj_ref = jnp.exp(-jnp.abs(idx[:, None] - idx[None, :]) / jnp.float32(math.e))
    support_ref = jnp.einsum('btc,co->bto', x, weight, precision=hi)
    gcn_ref = jnp.einsum('ts,bso->bto', adj_ref, support_ref, precision=hi)
    x_pad = jnp.pad(x, ((0, 0), (PAD, PAD), (0, 0)))
    res_ref = conv_b[None, None, :]
    for k in range(KSIZE):
        res_ref = res_ref + jnp.einsum('btc,oc->bto', x_pad[:, k:k + T, :],
                                       conv_w[:, :, k], precision=hi)
    ref = jax.nn.gelu(gcn_ref + res_ref, approximate=False)
    err = float(jnp.max(jnp.abs(out - ref)))
    assert err < 5e-2, f"max abs err vs reference: {err}"

    print("KERNEL_OK")
</pallas_src>

<mosaic_0001>
module attributes {stable_mosaic.version = 11 : i64} {
  func.func @gcn_kernel(%arg0: i32, %arg1: memref<32x161xf32, #tpu.memory_space<vmem>>, %arg2: memref<32x32xf32, #tpu.memory_space<vmem>>, %arg3: memref<161x32xf32, #tpu.memory_space<vmem>>, %arg4: memref<32x16xf32, #tpu.memory_space<vmem>>) attributes {dimension_semantics = [#tpu.dimension_semantics<arbitrary>], iteration_bounds = array<i64: 1>, scalar_prefetch = 0 : i64, scratch_operands = 0 : i64, tpu.core_type = #tpu.core_type<tc>, window_params = [{pipeline_mode = #tpu.pipeline_mode<synchronous>, transform_indices = @transform_0, window_bounds = array<i64: 32, 161>}, {pipeline_mode = #tpu.pipeline_mode<synchronous>, transform_indices = @transform_1, window_bounds = array<i64: 32, 32>}, {pipeline_mode = #tpu.pipeline_mode<synchronous>, transform_indices = @transform_2, window_bounds = array<i64: 161, 32>}, {pipeline_mode = #tpu.pipeline_mode<synchronous>, transform_indices = @transform_3, window_bounds = array<i64: 32, 16>}]} {
    %c0 = arith.constant 0 : index
    %c0_0 = arith.constant 0 : index
    %0 = vector.load %arg1[%c0, %c0_0] : memref<32x161xf32, #tpu.memory_space<vmem>>, vector<32x161xf32>
    %c0_1 = arith.constant 0 : index
    %c0_2 = arith.constant 0 : index
    %1 = vector.load %arg3[%c0_1, %c0_2] : memref<161x32xf32, #tpu.memory_space<vmem>>, vector<161x32xf32>
    %cst = arith.constant dense<0.000000e+00> : vector<32x32xf32>
    %2 = tpu.matmul %0, %1, %cst {dimension_numbers = #tpu.dot_dimension_numbers<[1], [0], [0], [1], [0, 0, 1, 1], [], []>} : vector<32x161xf32>, vector<161x32xf32>, vector<32x32xf32> -> vector<32x32xf32>
    %3 = vector.extract_strided_slice %2 {offsets = [0, 0], sizes = [32, 16], strides = [1, 1]} : vector<32x32xf32> to vector<32x16xf32>
    %4 = vector.extract_strided_slice %2 {offsets = [0, 16], sizes = [32, 16], strides = [1, 1]} : vector<32x32xf32> to vector<32x16xf32>
    %c0_3 = arith.constant 0 : index
    %c0_4 = arith.constant 0 : index
    %5 = vector.load %arg2[%c0_3, %c0_4] : memref<32x32xf32, #tpu.memory_space<vmem>>, vector<32x32xf32>
    %cst_5 = arith.constant dense<0.000000e+00> : vector<32x16xf32>
    %6 = tpu.matmul %5, %3, %cst_5 {dimension_numbers = #tpu.dot_dimension_numbers<[1], [0], [0], [1], [0, 0, 1, 1], [], []>} : vector<32x32xf32>, vector<32x16xf32>, vector<32x16xf32> -> vector<32x16xf32>
    %7 = arith.addf %6, %4 : vector<32x16xf32>
    %cst_6 = arith.constant 5.000000e-01 : f32
    %8 = vector.broadcast %cst_6 : f32 to vector<32x16xf32>
    %9 = arith.mulf %8, %7 : vector<32x16xf32>
    %cst_7 = arith.constant 0.707106769 : f32
    %10 = vector.broadcast %cst_7 : f32 to vector<32x16xf32>
    %11 = arith.mulf %7, %10 : vector<32x16xf32>
    %12 = math.erf %11 : vector<32x16xf32>
    %cst_8 = arith.constant 1.000000e+00 : f32
    %13 = vector.broadcast %cst_8 : f32 to vector<32x16xf32>
    %14 = arith.addf %13, %12 : vector<32x16xf32>
    %15 = arith.mulf %9, %14 : vector<32x16xf32>
    %c0_9 = arith.constant 0 : index
    %c0_10 = arith.constant 0 : index
    %16 = vector.load %arg4[%c0_9, %c0_10] : memref<32x16xf32, #tpu.memory_space<vmem>>, vector<32x16xf32>
    tpu.vector_store %arg4[%c0_9, %c0_10], %15 {strides = array<i32>} : memref<32x16xf32, #tpu.memory_space<vmem>>, vector<32x16xf32>,
    return
  }
  func.func @transform_0(%arg0: i32) -> (i32, i32) {
    %c0_i32 = arith.constant 0 : i32
    %c0_i32_0 = arith.constant 0 : i32
    %c0_i32_1 = arith.constant 0 : i32
    return %c0_i32, %c0_i32_0 : i32, i32
  }
  func.func @transform_1(%arg0: i32) -> (i32, i32) {
    %c0_i32 = arith.constant 0 : i32
    %c0_i32_0 = arith.constant 0 : i32
    %c0_i32_1 = arith.constant 0 : i32
    return %c0_i32, %c0_i32_0 : i32, i32
  }
  func.func @transform_2(%arg0: i32) -> (i32, i32) {
    %c0_i32 = arith.constant 0 : i32
    %c0_i32_0 = arith.constant 0 : i32
    %c0_i32_1 = arith.constant 0 : i32
    return %c0_i32, %c0_i32_0 : i32, i32
  }
  func.func @transform_3(%arg0: i32) -> (i32, i32) {
    %c0_i32 = arith.constant 0 : i32
    %c0_i32_0 = arith.constant 0 : i32
    %c0_i32_1 = arith.constant 0 : i32
    return %c0_i32, %c0_i32_0 : i32, i32
  }
}

</mosaic_0001>

<llo_original>
// kernel: gcn_forward.1
$region0: #{gcn_forward.1}
  #allocation0 [shape = 'u32[]', space=smem, size = 0x4, offset = 0x4, fixed_abs, tag = 'smem constant byte address 0x4 - core index']
  #allocation1 [shape = 'u32[72,128]{1,0:T(1,128)}', space=vmem, size = 0x9000, scoped, tag = 'internal scratch']
  %s0 = inlined_call_operand.vmem [shape: f32[32,161], index: 0, kind: input, shape index: {}]
  %s1 = inlined_call_operand.vmem [shape: f32[32,32], index: 1, kind: input, shape index: {}]
  %s2 = inlined_call_operand.vmem [shape: f32[161,32], index: 2, kind: input, shape index: {}]
  %s3 = inlined_call_operand.hbm [shape: f32[32,16], index: 3, kind: output, shape index: {}]
  %s4 = sld [smem:[#allocation0]]
  $region22: #{gcn_forward.1} parent=0
    _
  %s6 = ssub.s32 1, %s4
  %s7 = scalar_select 0, %s6, %s4
  $region1: #{gcn_forward.1} parent=0
    #allocation2 [shape = 'u8[16384]{0}', space=vmem, size = 0x4000, scoped, tag = 'output window, operand 0, single buffered']
    #allocation3 [shape = 's32[1]{0}', space=sflag, size = 0x4, scoped, tag = 'scoped memory for gcn_forward.1']
    %8 = vsyncpa [#allocation3], 0
    // Predicated region
    $region2: #{gcn_forward.1} parent=1 // pred_check
      _
    $region3: #{gcn_forward.1} parent=1 // pred_check_branch
      %10 = sbr.rel (0) target = $region5
    $region4: #{gcn_forward.1} parent=1 // pred_region
      _
    $region5: #{gcn_forward.1} parent=1 // pred_fallthru
      _
    // Predicated region
    $region6: #{gcn_forward.1} parent=1 // pred_check
      _
    $region7: #{gcn_forward.1} parent=1 // pred_check_branch
      %12 = sbr.rel (0) target = $region9
    $region8: #{gcn_forward.1} parent=1 // pred_region
      _
    $region9: #{gcn_forward.1} parent=1 // pred_fallthru
      _
    // Predicated region
    $region10: #{gcn_forward.1} parent=1 // pred_check
      _
    $region11: #{gcn_forward.1} parent=1 // pred_check_branch
      %14 = sbr.rel (0) target = $region13
    $region12: #{gcn_forward.1} parent=1 // pred_region
      _
    $region13: #{gcn_forward.1} parent=1 // pred_fallthru
      _
    %v15 = vld [vmem:[%s0] sm:$0xff]
    %v16 = vld [vmem:[%s0 + $0x8] sm:$0xff]
    %v17 = vld [vmem:[%s0 + $0x10] sm:$0xff]
    %v18 = vld [vmem:[%s0 + $0x18] sm:$0xff]
    %v19 = vld [vmem:[%s0 + $0x20] sm:$0xff]
    %v20 = vld [vmem:[%s0 + $0x28] sm:$0xff]
    %v21 = vld [vmem:[%s0 + $0x30] sm:$0xff]
    %v22 = vld [vmem:[%s0 + $0x38] sm:$0xff]
    %v23 = vld [vmem:[%s2] sm:$0xff]
    %v24 = vld [vmem:[%s2 + $0x8] sm:$0xff]
    %v25 = vld [vmem:[%s2 + $0x10] sm:$0xff]
    %v26 = vld [vmem:[%s2 + $0x18] sm:$0xff]
    %v27 = vld [vmem:[%s2 + $0x20] sm:$0xff]
    %v28 = vld [vmem:[%s2 + $0x28] sm:$0xff]
    %v29 = vld [vmem:[%s2 + $0x30] sm:$0xff]
    %v30 = vld [vmem:[%s2 + $0x38] sm:$0xff]
    %v31 = vld [vmem:[%s2 + $0x40] sm:$0xff]
    %v32 = vld [vmem:[%s2 + $0x48] sm:$0xff]
    %v33 = vld [vmem:[%s2 + $0x50] sm:$0xff]
    %v34 = vld [vmem:[%s2 + $0x58] sm:$0xff]
    %v35 = vld [vmem:[%s2 + $0x60] sm:$0xff]
    %v36 = vld [vmem:[%s2 + $0x68] sm:$0xff]
    %v37 = vld [vmem:[%s2 + $0x70] sm:$0xff]
    %v38 = vld [vmem:[%s2 + $0x78] sm:$0xff]
    %v39 = vld [vmem:[%s2 + $0x80] sm:$0xff]
    %v40 = vld [vmem:[%s2 + $0x88] sm:$0xff]
    %v41 = vld [vmem:[%s2 + $0x90] sm:$0xff]
    %v42 = vld [vmem:[%s2 + $0x98] sm:$0xff]
    %v43 = vld [vmem:[%s2 + $0xa0] sm:$0x1]
    %vm44 = vcmask 269312
    %v46 = vsel %vm44, %v16, 0
    %v49 = vsel %vm44, %v18, 0
    %v52 = vsel %vm44, %v20, 0
    %v55 = vsel %vm44, %v22, 0
    %vm57 = vcmask 1040384
    %v59 = vsel %vm57, %v43, 0
    %61 = vmatpush.msra.mxu0 %v38
    %62 = vmatpush.msra.mxu0 %v37
    %63 = vmatpush.msra.mxu0 %v36
    %64 = vmatpush.msra.mxu0 %v35
    %65 = vmatpush.msra.mxu0 %v34
    %66 = vmatpush.msra.mxu0 %v33
    %67 = vmatpush.msra.mxu0 %v32
    %68 = vmatpush.msra.mxu0 %v31
    %69 = vmatpush.msra.mxu0 %v30
    %70 = vmatpush.msra.mxu0 %v29
    %71 = vmatpush.msra.mxu0 %v28
    %72 = vmatpush.msra.mxu0 %v27
    %73 = vmatpush.msra.mxu0 %v26
    %74 = vmatpush.msra.mxu0 %v25
    %75 = vmatpush.msra.mxu0 %v24
    %76 = vmatpush.msra.mxu0 %v23
    %77 = vmatmul.f32.gmra.mxu0 %v15
    %v78 = vpop.f32.mrf.mxu0
    %v79 = vadd.f32 0.0, %v78
    %80 = vmatmul.f32.gmra.mxu0 %v17
    %v81 = vpop.f32.mrf.mxu0
    %v82 = vadd.f32 0.0, %v81
    %83 = vmatmul.f32.gmra.mxu0 %v19
    %v84 = vpop.f32.mrf.mxu0
    %v85 = vadd.f32 0.0, %v84
    %86 = vmatmul.f32.gmra.mxu0 %v21
    %v87 = vpop.f32.mrf.mxu0
    %v88 = vadd.f32 0.0, %v87
    %89 = vdwg.mxu0
    %90 = vmatpush.msra.mxu0 0.0
    %91 = vmatpush.msra.mxu0 0.0
    %92 = vmatpush.msra.mxu0 0.0
    %93 = vmatpush.msra.mxu0 0.0
    %94 = vmatpush.msra.mxu0 0.0
    %95 = vmatpush.msra.mxu0 0.0
    %96 = vmatpush.msra.mxu0 0.0
    %97 = vmatpush.msra.mxu0 0.0
    %98 = vmatpush.msra.mxu0 0.0
    %99 = vmatpush.msra.mxu0 0.0
    %100 = vmatpush.msra.mxu0 0.0
    %101 = vmatpush.msra.mxu0 %v59
    %102 = vmatpush.msra.mxu0 %v42
    %103 = vmatpush.msra.mxu0 %v41
    %104 = vmatpush.msra.mxu0 %v40
    %105 = vmatpush.msra.mxu0 %v39
    %106 = vmatmul.f32.gmra.mxu0 %v46
    %v107 = vpop.f32.mrf.mxu0
    %v108 = vadd.f32 %v79, %v107
    %109 = vmatmul.f32.gmra.mxu0 %v49
    %v110 = vpop.f32.mrf.mxu0
    %v111 = vadd.f32 %v82, %v110
    %112 = vmatmul.f32.gmra.mxu0 %v52
    %v113 = vpop.f32.mrf.mxu0
    %v114 = vadd.f32 %v85, %v113
    %115 = vmatmul.f32.gmra.mxu0 %v55
    %v116 = vpop.f32.mrf.mxu0
    %v117 = vadd.f32 %v88, %v116
    %118 = vdwg.mxu0
    %v119 = vld [vmem:[%s1] sm:$0xff]
    %v120 = vld [vmem:[%s1 + $0x8] sm:$0xff]
    %v121 = vld [vmem:[%s1 + $0x10] sm:$0xff]
    %v122 = vld [vmem:[%s1 + $0x18] sm:$0xff]
    %127 = vrot.lane.b32.xlu0 %v108, 112
    %v128 = vpop.permute.xlu0 %127
    %129 = vrot.lane.b32.xlu0 %v111, 112
    %v130 = vpop.permute.xlu0 %129
    %131 = vrot.lane.b32.xlu0 %v114, 112
    %v132 = vpop.permute.xlu0 %131
    %133 = vrot.lane.b32.xlu0 %v117, 112
    %v134 = vpop.permute.xlu0 %133
    %vm139 = vcmask 261120
    %v141 = vsel %vm139, %v119, 0
    %v144 = vsel %vm139, %v120, 0
    %v147 = vsel %vm139, %v121, 0
    %v150 = vsel %vm139, %v122, 0
    %152 = vmatpush.msra.mxu0 0.0
    %153 = vmatpush.msra.mxu0 0.0
    %154 = vmatpush.msra.mxu0 0.0
    %155 = vmatpush.msra.mxu0 0.0
    %156 = vmatpush.msra.mxu0 0.0
    %157 = vmatpush.msra.mxu0 0.0
    %158 = vmatpush.msra.mxu0 0.0
    %159 = vmatpush.msra.mxu0 0.0
    %160 = vmatpush.msra.mxu0 0.0
    %161 = vmatpush.msra.mxu0 0.0
    %162 = vmatpush.msra.mxu0 0.0
    %163 = vmatpush.msra.mxu0 0.0
    %164 = vmatpush.msra.mxu0 %v117
    %165 = vmatpush.msra.mxu0 %v114
    %166 = vmatpush.msra.mxu0 %v111
    %167 = vmatpush.msra.mxu0 %v108
    %168 = vmatmul.f32.gmra.mxu0 %v141
    %v169 = vpop.f32.mrf.mxu0
    %v170 = vadd.f32 %v128, %v169
    %171 = vmatmul.f32.gmra.mxu0 %v144
    %v172 = vpop.f32.mrf.mxu0
    %v173 = vadd.f32 %v130, %v172
    %174 = vmatmul.f32.gmra.mxu0 %v147
    %v175 = vpop.f32.mrf.mxu0
    %v176 = vadd.f32 %v132, %v175
    %177 = vmatmul.f32.gmra.mxu0 %v150
    %v178 = vpop.f32.mrf.mxu0
    %v179 = vadd.f32 %v134, %v178
    %180 = vdwg.mxu0
    %v181 = vmul.f32 %v170, 0.5
    %v182 = vmul.f32 %v173, 0.5
    %v183 = vmul.f32 %v176, 0.5
    %v184 = vmul.f32 %v179, 0.5
    %v185 = vmul.f32 %v170, 0.70710677
    %v186 = vmul.f32 %v173, 0.70710677
    %v187 = vmul.f32 %v176, 0.70710677
    %v188 = vmul.f32 %v179, 0.70710677
    %v189 = vmul.f32 %v185, %v185
    %v190 = vmin.f32 16.0, %v189
    %v191 = vmul.f32 %v190, 2.1237322e-06
    %v192 = vadd.f32 %v191, 0.00028619796
    %v193 = vmul.f32 %v190, %v192
    %v194 = vadd.f32 %v193, 0.0036580483
    %v195 = vmul.f32 %v190, %v194
    %v196 = vadd.f32 %v195, 0.05243302
    %v197 = vmul.f32 %v190, %v196
    %v198 = vadd.f32 %v197, 0.18741608
    %v199 = vmul.f32 %v190, %v198
    %v200 = vadd.f32 %v199, 1.1283791
    %v201 = vmul.f32 %v185, %v200
    %v202 = vmul.f32 %v190, 3.8918573e-05
    %v203 = vadd.f32 %v202, 0.001143296
    %v204 = vmul.f32 %v190, %v203
    %v205 = vadd.f32 %v204, 0.014752088
    %v206 = vmul.f32 %v190, %v205
    %v207 = vadd.f32 %v206, 0.112945676
    %v208 = vmul.f32 %v190, %v207
    %v209 = vadd.f32 %v208, 0.4994258
    %v210 = vmul.f32 %v190, %v209
    %v211 = vadd.f32 %v210, 1.0
    %v212 = vrcp.pop %v211
    %v213 = vmul.f32 %v211, %v212
    %v214 = vsub.f32 1.0, %v213
    %v215 = vmul.f32 %v212, %v214
    %v216 = vadd.f32 %v212, %v215
    %vm217 = vweird.f32 %v211
    %vm218 = vweird.f32 %v212
    %vm219 = vmor %vm217, %vm218
    %v220 = vsel %vm219, %v212, %v216
    %v221 = vand.u32 2147483647, %v211
    %vm222 = vcmp.eq.f32.partialorder %v221, 8.507059e+37
    %v223 = vand.u32 %v211, 2147483648
    %v224 = vor.u32 1.1754944e-38, %v223
    %v225 = vsel %vm222, %v224, %v220
    %v226 = vmul.f32 %v201, %v225
    %v227 = vmin.f32 %v226, 1.0
    %v228 = vmax.f32 %v227, -1.0
    %v229 = vmul.f32 %v186, %v186
    %v230 = vmin.f32 16.0, %v229
    %v231 = vmul.f32 %v230, 2.1237322e-06
    %v232 = vadd.f32 %v231, 0.00028619796
    %v233 = vmul.f32 %v230, %v232
    %v234 = vadd.f32 %v233, 0.0036580483
    %v235 = vmul.f32 %v230, %v234
    %v236 = vadd.f32 %v235, 0.05243302
    %v237 = vmul.f32 %v230, %v236
    %v238 = vadd.f32 %v237, 0.18741608
    %v239 = vmul.f32 %v230, %v238
    %v240 = vadd.f32 %v239, 1.1283791
    %v241 = vmul.f32 %v186, %v240
    %v242 = vmul.f32 %v230, 3.8918573e-05
    %v243 = vadd.f32 %v242, 0.001143296
    %v244 = vmul.f32 %v230, %v243
    %v245 = vadd.f32 %v244, 0.014752088
    %v246 = vmul.f32 %v230, %v245
    %v247 = vadd.f32 %v246, 0.112945676
    %v248 = vmul.f32 %v230, %v247
    %v249 = vadd.f32 %v248, 0.4994258
    %v250 = vmul.f32 %v230, %v249
    %v251 = vadd.f32 %v250, 1.0
    %v252 = vrcp.pop %v251
    %v253 = vmul.f32 %v251, %v252
    %v254 = vsub.f32 1.0, %v253
    %v255 = vmul.f32 %v252, %v254
    %v256 = vadd.f32 %v252, %v255
    %vm257 = vweird.f32 %v251
    %vm258 = vweird.f32 %v252
    %vm259 = vmor %vm257, %vm258
    %v260 = vsel %vm259, %v252, %v256
    %v261 = vand.u32 2147483647, %v251
    %vm262 = vcmp.eq.f32.partialorder %v261, 8.507059e+37
    %v263 = vand.u32 %v251, 2147483648
    %v264 = vor.u32 1.1754944e-38, %v263
    %v265 = vsel %vm262, %v264, %v260
    %v266 = vmul.f32 %v241, %v265
    %v267 = vmin.f32 %v266, 1.0
    %v268 = vmax.f32 %v267, -1.0
    %v269 = vmul.f32 %v187, %v187
    %v270 = vmin.f32 16.0, %v269
    %v271 = vmul.f32 %v270, 2.1237322e-06
    %v272 = vadd.f32 %v271, 0.00028619796
    %v273 = vmul.f32 %v270, %v272
    %v274 = vadd.f32 %v273, 0.0036580483
    %v275 = vmul.f32 %v270, %v274
    %v276 = vadd.f32 %v275, 0.05243302
    %v277 = vmul.f32 %v270, %v276
    %v278 = vadd.f32 %v277, 0.18741608
    %v279 = vmul.f32 %v270, %v278
    %v280 = vadd.f32 %v279, 1.1283791
    %v281 = vmul.f32 %v187, %v280
    %v282 = vmul.f32 %v270, 3.8918573e-05
    %v283 = vadd.f32 %v282, 0.001143296
    %v284 = vmul.f32 %v270, %v283
    %v285 = vadd.f32 %v284, 0.014752088
    %v286 = vmul.f32 %v270, %v285
    %v287 = vadd.f32 %v286, 0.112945676
    %v288 = vmul.f32 %v270, %v287
    %v289 = vadd.f32 %v288, 0.4994258
    %v290 = vmul.f32 %v270, %v289
    %v291 = vadd.f32 %v290, 1.0
    %v292 = vrcp.pop %v291
    %v293 = vmul.f32 %v291, %v292
    %v294 = vsub.f32 1.0, %v293
    %v295 = vmul.f32 %v292, %v294
    %v296 = vadd.f32 %v292, %v295
    %vm297 = vweird.f32 %v291
    %vm298 = vweird.f32 %v292
    %vm299 = vmor %vm297, %vm298
    %v300 = vsel %vm299, %v292, %v296
    %v301 = vand.u32 2147483647, %v291
    %vm302 = vcmp.eq.f32.partialorder %v301, 8.507059e+37
    %v303 = vand.u32 %v291, 2147483648
    %v304 = vor.u32 1.1754944e-38, %v303
    %v305 = vsel %vm302, %v304, %v300
    %v306 = vmul.f32 %v281, %v305
    %v307 = vmin.f32 %v306, 1.0
    %v308 = vmax.f32 %v307, -1.0
    %v309 = vmul.f32 %v188, %v188
    %v310 = vmin.f32 16.0, %v309
    %v311 = vmul.f32 %v310, 2.1237322e-06
    %v312 = vadd.f32 %v311, 0.00028619796
    %v313 = vmul.f32 %v310, %v312
    %v314 = vadd.f32 %v313, 0.0036580483
    %v315 = vmul.f32 %v310, %v314
    %v316 = vadd.f32 %v315, 0.05243302
    %v317 = vmul.f32 %v310, %v316
    %v318 = vadd.f32 %v317, 0.18741608
    %v319 = vmul.f32 %v310, %v318
    %v320 = vadd.f32 %v319, 1.1283791
    %v321 = vmul.f32 %v188, %v320
    %v322 = vmul.f32 %v310, 3.8918573e-05
    %v323 = vadd.f32 %v322, 0.001143296
    %v324 = vmul.f32 %v310, %v323
    %v325 = vadd.f32 %v324, 0.014752088
    %v326 = vmul.f32 %v310, %v325
    %v327 = vadd.f32 %v326, 0.112945676
    %v328 = vmul.f32 %v310, %v327
    %v329 = vadd.f32 %v328, 0.4994258
    %v330 = vmul.f32 %v310, %v329
    %v331 = vadd.f32 %v330, 1.0
    %v332 = vrcp.pop %v331
    %v333 = vmul.f32 %v331, %v332
    %v334 = vsub.f32 1.0, %v333
    %v335 = vmul.f32 %v332, %v334
    %v336 = vadd.f32 %v332, %v335
    %vm337 = vweird.f32 %v331
    %vm338 = vweird.f32 %v332
    %vm339 = vmor %vm337, %vm338
    %v340 = vsel %vm339, %v332, %v336
    %v341 = vand.u32 2147483647, %v331
    %vm342 = vcmp.eq.f32.partialorder %v341, 8.507059e+37
    %v343 = vand.u32 %v331, 2147483648
    %v344 = vor.u32 1.1754944e-38, %v343
    %v345 = vsel %vm342, %v344, %v340
    %v346 = vmul.f32 %v321, %v345
    %v347 = vmin.f32 %v346, 1.0
    %v348 = vmax.f32 %v347, -1.0
    %v349 = vadd.f32 %v228, 1.0
    %v350 = vadd.f32 %v268, 1.0
    %v351 = vadd.f32 %v308, 1.0
    %v352 = vadd.f32 %v348, 1.0
    %v353 = vmul.f32 %v181, %v349
    %v354 = vmul.f32 %v182, %v350
    %v355 = vmul.f32 %v183, %v351
    %v356 = vmul.f32 %v184, %v352
    %vm357 = vcmask 130048
    %358 = vst.msk [vmem:[#allocation2] sm:$0xff] %vm357, %v353
    %359 = vst.msk [vmem:[#allocation2 + $0x8] sm:$0xff] %vm357, %v354
    %360 = vst.msk [vmem:[#allocation2 + $0x10] sm:$0xff] %vm357, %v355
    %361 = vst.msk [vmem:[#allocation2 + $0x18] sm:$0xff] %vm357, %v356
    // Predicated region
    $region14: #{gcn_forward.1} parent=1 // pred_check
      _
    $region15: #{gcn_forward.1} parent=1 // pred_check_branch
      %363 = sbr.rel (0) target = $region17
    $region16: #{gcn_forward.1} parent=1 // pred_region
      %365 = vsyncadd [#allocation3], 0
      %s366 = sshll.u32 [#allocation2], 4
      %s367 = int_to_ptr.vmem [resolvable:$true] %s366
      %s368 = sshll.u32 %s3, 4
      %s369 = int_to_ptr.hbm [resolvable:$true] %s368
      %374 = dma.vmem_to_hbm [thread:$0]  %s367, 512, %s369, [#allocation3], 128, 128, 8
    $region17: #{gcn_forward.1} parent=1 // pred_fallthru
      _
    // Predicated region
    $region18: #{gcn_forward.1} parent=1 // pred_check
      _
    $region19: #{gcn_forward.1} parent=1 // pred_check_branch
      %376 = sbr.rel (0) target = $region21
    $region20: #{gcn_forward.1} parent=1 // pred_region
      %378 = dma.done [#allocation3], 512
    $region21: #{gcn_forward.1} parent=1 // pred_fallthru
      _
    %379 = vsyncpa [#allocation3], 1

</llo_original>
